<compile_context>
chip_gen: v7x
topology: tpu7x:2x2x1
jax: 0.10.0
libtpu: 0.0.40
codegen_flags: <defaults>
</compile_context>

<pallas_src>
import functools
import math

import jax
import jax.numpy as jnp
from jax import lax
from jax.experimental import pallas as pl
from jax.experimental.pallas import tpu as pltpu

C = 256                       # fixed by the module (proj_1 out_channels)
GROUPS = 32
CPG = C // GROUPS             # 8 channels per GroupNorm group
GN_EPS = 1e-5


def _gelu_exact(x):
    return 0.5 * x * (1.0 + lax.erf(x * jnp.float32(1.0 / math.sqrt(2.0))))


def _vmem_limit_bytes() -> int:
    """Per-generation VMEM budget (v7x has 64 MiB/core, v5e/v6e 128 MiB)."""
    try:
        cap = int(pltpu.get_tpu_info().vmem_capacity_bytes)
    except Exception:  # conservative fallback if the query is unavailable
        cap = 64 * 1024 * 1024
    return max(16 * 1024 * 1024, min(cap * 3 // 4, 64 * 1024 * 1024))


@functools.lru_cache(maxsize=None)
def _roll_matches_numpy() -> bool:
    """Probe pltpu.roll's rotation direction once (tiny kernel) so the
    depthwise-conv shift math is robust to either convention."""
    def k(x_ref, o_ref):
        o_ref[...] = pltpu.roll(x_ref[...], 1, axis=0)
    x = jnp.arange(8 * 128, dtype=jnp.float32).reshape(8, 128)
    y = pl.pallas_call(k, out_shape=jax.ShapeDtypeStruct((8, 128), jnp.float32))(x)
    return bool(jnp.array_equal(y, jnp.roll(x, 1, axis=0)))


def _col_rot_shift(off, n, roll_np):
    """Static roll amount s so that rolled[j] == row[(j + off) % n]."""
    return (-off) % n if roll_np else off % n


def _make_mda_kernel(H, W, RB, roll_np):
    HW = H * W
    TM = RB * W               # rows of the (HW, 256) matrices per matmul block
    NBLK = H // RB
    W0P = W + 8               # padded width for the 5x5 dw conv   (>= W + 4)
    W1P = W + 16              # padded width for the dilated 7x7   (>= W + 9)
    H0P = H + 4
    H1P = H + 18

    def kernel(x_ref, w1_ref, b1_ref, gamma_ref, beta_ref,
               w3_ref, b3_ref,
               w0_ref, b0_ref, ws_ref, bs_ref,
               wl1_ref, bl1_ref, lscale_ref, g_ref, gt_ref,
               o_ref,
               t_ref, acc2_ref, pad0_ref, pad1_ref):
        f32 = jnp.float32
        bf16 = jnp.bfloat16

        # ---- zero only the halo rows of the padded dw-conv scratch --------
        # (interior rows, including their zero column tails, are fully
        #  rewritten by aligned stores below every grid step)
        pad0_ref[0:2, :, :] = jnp.zeros((2, W0P, C), f32)
        pad0_ref[2 + H:H0P, :, :] = jnp.zeros((2, W0P, C), f32)
        pad1_ref[0:9, :, :] = jnp.zeros((9, W1P, C), f32)
        pad1_ref[9 + H:H1P, :, :] = jnp.zeros((9, W1P, C), f32)

        # ---- phase A: proj_1 (1x1 conv == bf16 MXU matmul) + GN stats -----
        w1 = w1_ref[...]                       # (Cin, 256) bf16
        b1 = b1_ref[...]                       # (1, 256)  f32

        def body_a(b, carry):
            csum, cssq = carry
            r0 = pl.multiple_of(b * TM, 8)
            xb = x_ref[pl.ds(r0, TM), :].astype(bf16)
            tb = jnp.dot(xb, w1, preferred_element_type=f32) + b1
            t_ref[pl.ds(r0, TM), :] = tb
            csum = csum + jnp.sum(tb, axis=0, keepdims=True)
            cssq = cssq + jnp.sum(tb * tb, axis=0, keepdims=True)
            return csum, cssq

        zrow = jnp.zeros((1, C), f32)
        ch_sum, ch_ssq = lax.fori_loop(0, NBLK, body_a, (zrow, zrow))

        # ---- GroupNorm(32, 256) statistics (group reduce via 0/1 matmuls) -
        cnt = jnp.float32(HW * CPG)
        mean_c = jnp.dot(jnp.dot(ch_sum, g_ref[...], preferred_element_type=f32),
                         gt_ref[...], preferred_element_type=f32) / cnt
        ex2_c = jnp.dot(jnp.dot(ch_ssq, g_ref[...], preferred_element_type=f32),
                        gt_ref[...], preferred_element_type=f32) / cnt
        var_c = jnp.maximum(ex2_c - mean_c * mean_c, 0.0)
        inv_c = lax.rsqrt(var_c + jnp.float32(GN_EPS))
        scale_c = gamma_ref[...] * inv_c                 # (1, 256)
        shift_c = beta_ref[...] - mean_c * scale_c       # (1, 256)

        # ---- phase C: GN -> proj_3 -> GELU, write into pad0 interior ------
        w3 = w3_ref[...]
        b3 = b3_ref[...]
        ztail0 = jnp.zeros((RB, W0P - W, C), f32)

        def body_c(b, _):
            r0 = pl.multiple_of(b * TM, 8)
            tb = t_ref[pl.ds(r0, TM), :]
            shb = tb * scale_c + shift_c
            ab = jnp.dot(shb.astype(bf16), w3, preferred_element_type=f32) + b3
            ab = _gelu_exact(ab)
            a3 = jnp.concatenate([ab.reshape(RB, W, C), ztail0], axis=1)
            pad0_ref[pl.ds(2 + b * RB, RB), :, :] = a3
            return 0

        lax.fori_loop(0, NBLK, body_c, 0)

        # ---- phase D: depthwise 5x5, padding=2 (row at a time) ------------
        b0 = b0_ref[...]
        ztail1 = jnp.zeros((W1P - W, C), f32)

        def body_d(i, _):
            acc = jnp.zeros((W, C), f32)
            for di in range(5):
                row = pad0_ref[i + di]          # (W0P, 256) aligned load
                for dj in range(5):
                    s = _col_rot_shift(dj - 2, W0P, roll_np)
                    r = row if s == 0 else pltpu.roll(row, s, axis=0)
                    acc = acc + r[0:W, :] * w0_ref[di * 5 + dj]
            acc = acc + b0
            pad1_ref[9 + i] = jnp.concatenate([acc, ztail1], axis=0)
            return 0

        lax.fori_loop(0, H, body_d, 0)

        # ---- phase E1: depthwise 7x7, dilation=3, padding=9 ---------------
        bs = bs_ref[...]

        def body_e1(i, _):
            acc = jnp.zeros((W, C), f32)
            for di in range(7):
                row = pad1_ref[i + 3 * di]      # (W1P, 256) aligned load
                for dj in range(7):
                    s = _col_rot_shift(3 * dj - 9, W1P, roll_np)
                    r = row if s == 0 else pltpu.roll(row, s, axis=0)
                    acc = acc + r[0:W, :] * ws_ref[di * 7 + dj]
            acc = acc + bs
            r0 = pl.multiple_of(i * W, 8)
            acc2_ref[pl.ds(r0, W), :] = acc
            return 0

        lax.fori_loop(0, H, body_e1, 0)

        # ---- phase E2: LKA conv1 (1x1) + gate + residual + layer scale ----
        wl1 = wl1_ref[...]
        bl1 = bl1_ref[...]
        lsc = lscale_ref[...]

        def body_e2(b, _):
            r0 = pl.multiple_of(b * TM, 8)
            accb = acc2_ref[pl.ds(r0, TM), :]
            attn = jnp.dot(accb.astype(bf16), wl1, preferred_element_type=f32) + bl1
            u = pad0_ref[pl.ds(2 + b * RB, RB), :, :][:, 0:W, :].reshape(TM, C)
            tb = t_ref[pl.ds(r0, TM), :]
            shb = tb * scale_c + shift_c
            # TODO(synk): Dropout(p=0.1) is identity here (eval-mode semantics).
            o_ref[pl.ds(r0, TM), :] = tb + lsc * (shb + u * attn)
            return 0

        lax.fori_loop(0, NBLK, body_e2, 0)

    return kernel


def mda_forward(x_nhwc, params):
    """x_nhwc: (N, H, W, Cin) float32 -> (N, H, W, 256) float32."""
    N, H, W, Cin = x_nhwc.shape
    assert W % 8 == 0, "kernel assumes W is a multiple of 8"
    RB = 4 if H % 4 == 0 else (2 if H % 2 == 0 else 1)
    HW = H * W
    f32, bf16 = jnp.float32, jnp.bfloat16

    # bf16 weights for the MXU matmuls; dw-conv taps pre-replicated across W.
    w1 = params["w1"].astype(bf16)
    w3 = params["w3"].astype(bf16)
    wl1 = params["wl1"].astype(bf16)
    w0b = jnp.broadcast_to(params["w0"].reshape(25, 1, C), (25, W, C)).astype(f32)
    wsb = jnp.broadcast_to(params["ws"].reshape(49, 1, C), (49, W, C)).astype(f32)
    G = (jnp.arange(C)[:, None] // CPG == jnp.arange(GROUPS)[None, :]).astype(f32)

    plist = [w1, params["b1"], params["gamma"], params["beta"],
             w3, params["b3"],
             w0b, params["b0"], wsb, params["bs"],
             wl1, params["bl1"], params["lscale"], G, G.T]

    x2d = x_nhwc.reshape(N, HW, Cin)

    def const_spec(arr):
        nd = arr.ndim
        return pl.BlockSpec(arr.shape, lambda n, _nd=nd: (0,) * _nd)

    in_specs = ([pl.BlockSpec((None, HW, Cin), lambda n: (n, 0, 0))]
                + [const_spec(p) for p in plist])
    out_specs = pl.BlockSpec((None, HW, C), lambda n: (n, 0, 0))

    scratch_shapes = [
        pltpu.VMEM((HW, C), f32),              # t     (proj_1 output)
        pltpu.VMEM((HW, C), f32),              # acc2  (conv_spatial output)
        pltpu.VMEM((H + 4, W + 8, C), f32),    # zero-tailed 'a' for 5x5 dw
        pltpu.VMEM((H + 18, W + 16, C), f32),  # zero-tailed acc for dil. 7x7
    ]

    kernel = _make_mda_kernel(H, W, RB, _roll_matches_numpy())

    out2d = pl.pallas_call(
        kernel,
        out_shape=jax.ShapeDtypeStruct((N, HW, C), f32),
        grid_spec=pltpu.PrefetchScalarGridSpec(
            num_scalar_prefetch=0,
            grid=(N,),
            in_specs=in_specs,
            out_specs=out_specs,
            scratch_shapes=scratch_shapes),
        compiler_params=pltpu.CompilerParams(
            dimension_semantics=("parallel",),
            vmem_limit_bytes=_vmem_limit_bytes()),
    )(x2d, *plist)
    return out2d.reshape(N, H, W, C)


def make_params(key, cin):
    """Deterministic synthetic parameters matching MDA._init_weights."""
    ks = jax.random.split(key, 5)
    f32 = jnp.float32
    zrow = jnp.zeros((1, C), f32)
    return dict(
        w1=jax.random.normal(ks[0], (cin, C), f32) * math.sqrt(2.0 / C),
        b1=zrow,
        gamma=jnp.ones((1, C), f32), beta=zrow,         # GroupNorm defaults
        w3=jax.random.normal(ks[1], (C, C), f32) * math.sqrt(2.0 / C),
        b3=zrow,
        w0=jax.random.normal(ks[2], (5, 5, C), f32) * math.sqrt(2.0 / 25.0),
        b0=zrow,
        ws=jax.random.normal(ks[3], (7, 7, C), f32) * math.sqrt(2.0 / 49.0),
        bs=zrow,
        wl1=jax.random.normal(ks[4], (C, C), f32) * math.sqrt(2.0 / C),
        bl1=zrow,
        lscale=jnp.full((1, C), 0.01, f32),
    )


def mda_reference(x_nchw, p):
    """Pure-JAX NCHW reference mirroring the PyTorch module (eval mode)."""
    hi = lax.Precision.HIGHEST

    def conv1x1(x, w, b):
        return (jnp.einsum("nchw,cd->ndhw", x, w, precision=hi)
                + b.reshape(1, -1, 1, 1))

    def dwconv(x, w_hwc, b, pad, dil):
        k = jnp.transpose(w_hwc, (2, 0, 1))[:, None, :, :]      # (C,1,kh,kw)
        y = lax.conv_general_dilated(
            x, k, window_strides=(1, 1), padding=((pad, pad), (pad, pad)),
            rhs_dilation=(dil, dil), feature_group_count=C,
            dimension_numbers=("NCHW", "OIHW", "NCHW"), precision=hi)
        return y + b.reshape(1, -1, 1, 1)

    t = conv1x1(x_nchw, p["w1"], p["b1"])
    n, c, h, w = t.shape
    tg = t.reshape(n, GROUPS, CPG, h, w)
    mean = tg.mean(axis=(2, 3, 4), keepdims=True)
    var = tg.var(axis=(2, 3, 4), keepdims=True)
    sh = ((tg - mean) * lax.rsqrt(var + GN_EPS)).reshape(n, c, h, w)
    sh = sh * p["gamma"].reshape(1, -1, 1, 1) + p["beta"].reshape(1, -1, 1, 1)
    a = _gelu_exact(conv1x1(sh, p["w3"], p["b3"]))
    attn = dwconv(a, p["w0"], p["b0"], 2, 1)
    attn = dwconv(attn, p["ws"], p["bs"], 9, 3)
    attn = conv1x1(attn, p["wl1"], p["bl1"])
    att = sh + a * attn
    return t + p["lscale"].reshape(1, -1, 1, 1) * att


if __name__ == "__main__":
    key = jax.random.PRNGKey(0)
    kx, kp = jax.random.split(key)

    N, Cin, H, W = 2, 64, 16, 16
    x_nchw = jax.random.normal(kx, (N, Cin, H, W), jnp.float32)  # PyTorch NCHW
    x_nhwc = jnp.transpose(x_nchw, (0, 2, 3, 1))                 # kernel layout

    params = make_params(kp, Cin)
    out_nhwc = jax.block_until_ready(mda_forward(x_nhwc, params))
    assert out_nhwc.shape == (N, H, W, C) and out_nhwc.dtype == jnp.float32

    ref_nhwc = jnp.transpose(mda_reference(x_nchw, params), (0, 2, 3, 1))
    max_err = float(jnp.max(jnp.abs(out_nhwc - ref_nhwc)))
    assert max_err < 5e-2, f"kernel deviates from reference: max |err| = {max_err}"
    print("KERNEL_OK")
</pallas_src>

<mosaic_0001>
module attributes {stable_mosaic.version = 11 : i64} {
  func.func @k(%arg0: memref<8x128xf32, #tpu.memory_space<vmem>>, %arg1: memref<8x128xf32, #tpu.memory_space<vmem>>) attributes {dimension_semantics = [], scalar_prefetch = 0 : i64, scratch_operands = 0 : i64, tpu.core_type = #tpu.core_type<tc>} {
    %c0 = arith.constant 0 : index
    %c0_0 = arith.constant 0 : index
    %0 = vector.load %arg0[%c0, %c0_0] : memref<8x128xf32, #tpu.memory_space<vmem>>, vector<8x128xf32>
    %c1_i32 = arith.constant 1 : i32
    %1 = tpu.dynamic_rotate %0 by %c1_i32 dim 0 : vector<8x128xf32>, i32 -> vector<8x128xf32>
    %c0_1 = arith.constant 0 : index
    %c0_2 = arith.constant 0 : index
    %2 = vector.load %arg1[%c0_1, %c0_2] : memref<8x128xf32, #tpu.memory_space<vmem>>, vector<8x128xf32>
    tpu.vector_store %arg1[%c0_1, %c0_2], %1 {strides = array<i32>} : memref<8x128xf32, #tpu.memory_space<vmem>>, vector<8x128xf32>,
    return
  }
}

</mosaic_0001>

<llo_original>
// kernel: tpu_custom_call.1
$region0: #{tpu_custom_call.1}
  #allocation0 [shape = 'u32[]', space=smem, size = 0x4, offset = 0x4, fixed_abs, tag = 'smem constant byte address 0x4 - core index']
  #allocation1 [shape = 'u32[144,128]{1,0:T(1,128)}', space=vmem, size = 0x12000, scoped, tag = 'internal scratch']
  %s0 = inlined_call_operand.hbm [shape: f32[8,128], index: 0, kind: input, shape index: {}]
  %s1 = inlined_call_operand.hbm [shape: f32[8,128], index: 1, kind: output, shape index: {}]
  %s2 = sld [smem:[#allocation0]]
  $region18: #{tpu_custom_call.1} parent=0
    _
  %s4 = ssub.s32 1, %s2
  %s5 = scalar_select 0, %s4, %s2
  $region1: #{tpu_custom_call.1} parent=0
    #allocation2 [shape = 'u8[4096]{0}', space=vmem, size = 0x1000, scoped, tag = 'input window, operand 0, single buffered']
    #allocation3 [shape = 's32[1]{0}', space=sflag, size = 0x4, scoped, tag = 'scoped memory for tpu_custom_call.1']
    #allocation4 [shape = 's32[1]{0}', space=sflag, size = 0x4, scoped, tag = 'scoped memory for tpu_custom_call.1']
    #allocation5 [shape = 'u8[4096]{0}', space=vmem, size = 0x1000, scoped, tag = 'output window, operand 0, single buffered']
    %6 = vsyncpa [#allocation3], 0
    %7 = vsyncpa [#allocation4], 0
    // Predicated region
    $region2: #{tpu_custom_call.1} parent=1 // pred_check
      _
    $region3: #{tpu_custom_call.1} parent=1 // pred_check_branch
      %9 = sbr.rel (0) target = $region5
    $region4: #{tpu_custom_call.1} parent=1 // pred_region
      %s11 = ssub.s32 128, 128
      %12 = vsyncadd [#allocation3], %s11
      %s14 = sshll.u32 [#allocation2], 4
      %s15 = int_to_ptr.vmem [resolvable:$true] %s14
      %17 = dma.hbm_to_vmem [thread:$0]  %s0, 128, %s15, [#allocation3]
    $region5: #{tpu_custom_call.1} parent=1 // pred_fallthru
      _
    // Predicated region
    $region6: #{tpu_custom_call.1} parent=1 // pred_check
      _
    $region7: #{tpu_custom_call.1} parent=1 // pred_check_branch
      %19 = sbr.rel (0) target = $region9
    $region8: #{tpu_custom_call.1} parent=1 // pred_region
      %20 = dma.done [#allocation3], 128
    $region9: #{tpu_custom_call.1} parent=1 // pred_fallthru
      _
    %v21 = vld [vmem:[#allocation2] sm:$0xff]
    %v22 = vrot.slane %v21, 7
    %23 = vst [vmem:[#allocation5] sm:$0xff] %v22
    // Predicated region
    $region10: #{tpu_custom_call.1} parent=1 // pred_check
      _
    $region11: #{tpu_custom_call.1} parent=1 // pred_check_branch
      %25 = sbr.rel (0) target = $region13
    $region12: #{tpu_custom_call.1} parent=1 // pred_region
      %s27 = ssub.s32 128, 128
      %28 = vsyncadd [#allocation4], %s27
      %s30 = sshll.u32 [#allocation5], 4
      %s31 = int_to_ptr.vmem [resolvable:$true] %s30
      %33 = dma.vmem_to_hbm [thread:$0]  %s31, 128, %s1, [#allocation4]
    $region13: #{tpu_custom_call.1} parent=1 // pred_fallthru
      _
    // Predicated region
    $region14: #{tpu_custom_call.1} parent=1 // pred_check
      _
    $region15: #{tpu_custom_call.1} parent=1 // pred_check_branch
      %35 = sbr.rel (0) target = $region17
    $region16: #{tpu_custom_call.1} parent=1 // pred_region
      %36 = dma.done [#allocation4], 128
    $region17: #{tpu_custom_call.1} parent=1 // pred_fallthru
      _
    %37 = vsyncpa [#allocation3], 1
    %38 = vsyncpa [#allocation4], 1

</llo_original>
